<compile_context>
chip_gen: v7x
topology: tpu7x:2x2x1
jax: 0.10.0
libtpu: 0.0.40
codegen_flags: <defaults>
</compile_context>

<pallas_src>
import jax
import jax.numpy as jnp
from jax.experimental import pallas as pl
from jax.experimental.pallas import tpu as pltpu

# ---- static config (small, consistent with the module) ----------------------
B = 2            # batch
CIN = 4          # input channels
H = W = 16       # spatial
KH = KW = 3      # conv kernel (padding=1, stride=1)
CMID = 16        # conv output channels
N_STYLES = 8     # number of style codes produced by the encoder (>= 7)
D = 32           # latent dim per style
HW = H * W                                    # 256
OUT_FEAT = N_STYLES * D                       # 256
STYLE_LO, STYLE_HI = 3, 7
OUT_SLICE = (STYLE_HI - STYLE_LO) * D         # 128 -> one lane-dense row

# Padded-image geometry: conv shifts are constant lane offsets on the
# flattened image with row stride PW.
PW = 20                      # 1 left pad + 16 + 1 right pad + 2 slack cols
PH = 22                      # 1 top pad + 16 + 1 bottom pad + 4 slack rows
FLAT = PH * PW               # 440
LSLICE = 384                 # 3 full vregs; max slice start 2*PW+2=42, 42+384<=440
KSTACK = KH * KW * CIN       # 36 contraction rows
KPAD = 40                    # stack rows padded to a sublane multiple of 8

# Packed parameter slab layout (rows, LSLICE) -- all offsets 8-aligned.
ROW_W1 = 0       # rows  0:16, cols 0:KPAD   (cols 36:40 zero)
ROW_B1 = 16      # rows 16:32, full LSLICE   (b1 pre-broadcast)
ROW_W2 = 32      # rows 32:48, cols 0:OUT_SLICE
ROW_MASK = 48    # row  48,    full LSLICE   (1/HW on valid positions, else 0)
ROW_B2 = 56      # row  56,    cols 0:OUT_SLICE
SLAB_ROWS = 64


def encoder_kernel(x_ref, p_ref, o_ref, pad_ref, stk_ref):
    """Fused encoder hot path (batch 0, styles 3:7 only).

    x:   (B*CIN, HW)        lane-dense input rows (only rows 0:CIN are used)
    p:   (SLAB_ROWS, LSLICE) packed parameter slab (see ROW_* layout)
    out: (1, OUT_SLICE)     lane-dense row == codes[0, 3:7] flattened
    pad: (CIN, FLAT)        VMEM scratch: zero-padded image, row stride PW
    stk: (KPAD, LSLICE)     VMEM scratch: stacked shifted conv views
    """
    # --- in-kernel zero padding (no wrapper pad op, no HBM round trip) ------
    pad_ref[...] = jnp.zeros_like(pad_ref)
    for y in range(H):                                  # 16 static row stores
        dst = PW * (y + 1) + 1
        pad_ref[:, dst:dst + W] = x_ref[0:CIN, y * W:(y + 1) * W]

    # --- stack the 9 shifted views: stk[k*CIN+cin, q] = pad[cin, q + i*PW+j] -
    stk_ref[...] = jnp.zeros_like(stk_ref)              # also zeroes pad rows 36:40
    for i in range(KH):
        for j in range(KW):
            k = i * KW + j
            s = i * PW + j                               # static lane offset
            stk_ref[k * CIN:(k + 1) * CIN, :] = pad_ref[:, s:s + LSLICE]

    # --- static views into the packed parameter slab ------------------------
    w1 = p_ref[ROW_W1:ROW_W1 + CMID, 0:KPAD]            # (16, 40)
    b1 = p_ref[ROW_B1:ROW_B1 + CMID, :]                  # (16, 384) pre-broadcast
    w2 = p_ref[ROW_W2:ROW_W2 + CMID, 0:OUT_SLICE]        # (16, 128)
    mask = p_ref[ROW_MASK:ROW_MASK + 1, :]                # (1, 384)
    b2 = p_ref[ROW_B2:ROW_B2 + 1, 0:OUT_SLICE]            # (1, 128)

    # --- Conv2d(CIN, CMID, 3, pad=1) as ONE stacked MXU matmul + bias + ReLU -
    h = jnp.dot(w1, stk_ref[...], preferred_element_type=jnp.float32)  # (16,384)
    h = jnp.maximum(h + b1, 0.0)

    # --- global average pool: masked lane reduction (mask carries 1/HW and
    #     zeroes both the x-padding columns and the y >= H slack rows) --------
    pooled = jnp.sum(h * mask, axis=1, keepdims=True)    # (16, 1)

    # --- final linear restricted to styles 3:7: sublane reduce (no MXU) ------
    o_ref[...] = jnp.sum(pooled * w2, axis=0, keepdims=True) + b2


def _encoder_call(x_rows, params_slab):
    # Single invocation: no grid, no pipelining, everything resident in VMEM
    # (< 200 KiB total -- far under every generation's VMEM).
    vmem = pltpu.MemorySpace.VMEM
    flops = 2 * CMID * KPAD * LSLICE + 6 * CMID * LSLICE + 2 * CMID * OUT_SLICE
    bytes_accessed = 4 * (x_rows.size + params_slab.size + OUT_SLICE)
    return pl.pallas_call(
        encoder_kernel,
        out_shape=jax.ShapeDtypeStruct((1, OUT_SLICE), jnp.float32),
        in_specs=[pl.BlockSpec(memory_space=vmem),
                  pl.BlockSpec(memory_space=vmem)],
        out_specs=pl.BlockSpec(memory_space=vmem),
        scratch_shapes=[pltpu.VMEM((CIN, FLAT), jnp.float32),
                        pltpu.VMEM((KPAD, LSLICE), jnp.float32)],
        cost_estimate=pl.CostEstimate(flops=flops, transcendentals=0,
                                      bytes_accessed=bytes_accessed),
    )(x_rows, params_slab)


@jax.jit
def newnet_forward(x, params_slab):
    """Reproduces NewNet.forward: codes = encoder(x); return codes[0][3:7]."""
    # Only batch 0 / styles 3:7 are ever returned.  The only wrapper-side op is
    # a metadata-only reshape of the contiguous NCHW input to lane-dense rows.
    x_rows = x.reshape(B * CIN, HW)                        # (8, 256)
    out_row = _encoder_call(x_rows, params_slab)           # (1, 128)
    return out_row.reshape(STYLE_HI - STYLE_LO, D)         # (4, 32)


def init_params(key):
    """Deterministic synthetic encoder parameters (PyTorch-style layouts)."""
    k1, k2, k3, k4 = jax.random.split(key, 4)
    w_conv = jax.random.normal(k1, (CMID, CIN, KH, KW), jnp.float32) * 0.1
    b1 = jax.random.normal(k2, (CMID,), jnp.float32) * 0.01
    w2 = jax.random.normal(k3, (CMID, OUT_FEAT), jnp.float32) * 0.1
    b2 = jax.random.normal(k4, (OUT_FEAT,), jnp.float32) * 0.01
    return w_conv, b1, w2, b2


def prepare_kernel_params(w_conv, b1, w2, b2):
    """One-time repack of all parameters into a single lane-dense f32 slab."""
    # (CMID, CIN, KH, KW) -> (CMID, KH*KW*CIN): column index = (i*KW + j)*CIN + cin
    w1_stack = jnp.transpose(w_conv, (0, 2, 3, 1)).reshape(CMID, KSTACK)
    q = jnp.arange(LSLICE)
    valid = ((q % PW) < W) & ((q // PW) < H)               # exactly HW valid cols
    mask_row = jnp.where(valid, 1.0 / HW, 0.0).astype(jnp.float32)

    slab = jnp.zeros((SLAB_ROWS, LSLICE), jnp.float32)
    slab = slab.at[ROW_W1:ROW_W1 + CMID, 0:KSTACK].set(w1_stack)
    slab = slab.at[ROW_B1:ROW_B1 + CMID, :].set(
        jnp.broadcast_to(b1.reshape(CMID, 1), (CMID, LSLICE)))
    slab = slab.at[ROW_W2:ROW_W2 + CMID, 0:OUT_SLICE].set(
        w2[:, STYLE_LO * D:STYLE_HI * D])
    slab = slab.at[ROW_MASK, :].set(mask_row)
    slab = slab.at[ROW_B2, 0:OUT_SLICE].set(b2[STYLE_LO * D:STYLE_HI * D])
    return slab


def reference_forward(x, w_conv, b1, w2, b2):
    """Plain-JAX reference (matmul-free, exact f32) of the same forward."""
    xpad = jnp.pad(x[0], ((0, 0), (1, 1), (1, 1)))
    h = jnp.zeros((CMID, H, W), jnp.float32)
    for i in range(KH):
        for j in range(KW):
            h = h + jnp.sum(w_conv[:, :, i, j][:, :, None, None]
                            * xpad[None, :, i:i + H, j:j + W], axis=1)
    h = jnp.maximum(h + b1.reshape(CMID, 1, 1), 0.0)
    pooled = jnp.mean(h, axis=(1, 2))                         # (CMID,)
    flat = jnp.sum(pooled[:, None] * w2, axis=0) + b2         # (OUT_FEAT,)
    return flat.reshape(N_STYLES, D)[STYLE_LO:STYLE_HI]       # (4, D)


if __name__ == "__main__":
    key = jax.random.PRNGKey(0)
    kx, kp = jax.random.split(key)
    x = jax.random.normal(kx, (B, CIN, H, W), jnp.float32)    # NCHW input
    raw_params = init_params(kp)
    params_slab = prepare_kernel_params(*raw_params)

    out = jax.block_until_ready(newnet_forward(x, params_slab))

    assert out.shape == (STYLE_HI - STYLE_LO, D), out.shape
    assert bool(jnp.all(jnp.isfinite(out)))

    ref = reference_forward(x, *raw_params)
    err = float(jnp.max(jnp.abs(out - ref)))
    # Tightened vs. the previous 5e-2/5e-3: any layout/offset regression gives
    # O(0.1) errors, while the only remaining slack is the MXU's possibly
    # reduced-precision f32 (bf16-pass) matmul under DEFAULT precision.
    assert bool(jnp.allclose(out, ref, rtol=1e-2, atol=2e-3)), (
        "max abs diff vs reference: %f" % err)

    print("KERNEL_OK")
</pallas_src>

<mosaic_0001>
module attributes {stable_mosaic.version = 11 : i64} {
  func.func @encoder_kernel(%arg0: memref<8x256xf32, #tpu.memory_space<vmem>>, %arg1: memref<64x384xf32, #tpu.memory_space<vmem>>, %arg2: memref<1x128xf32, #tpu.memory_space<vmem>>, %arg3: memref<4x440xf32, #tpu.memory_space<vmem>>, %arg4: memref<40x384xf32, #tpu.memory_space<vmem>>) attributes {dimension_semantics = [], scalar_prefetch = 0 : i64, scratch_operands = 2 : i64, tpu.core_type = #tpu.core_type<tc>} {
    %cst = arith.constant 0.000000e+00 : f32
    %0 = vector.broadcast %cst : f32 to vector<4x440xf32>
    %c0 = arith.constant 0 : index
    %c0_0 = arith.constant 0 : index
    %1 = vector.load %arg3[%c0, %c0_0] : memref<4x440xf32, #tpu.memory_space<vmem>>, vector<4x440xf32>
    tpu.vector_store %arg3[%c0, %c0_0], %0 {strides = array<i32>} : memref<4x440xf32, #tpu.memory_space<vmem>>, vector<4x440xf32>,
    %c0_1 = arith.constant 0 : index
    %c0_2 = arith.constant 0 : index
    %2 = vector.load %arg0[%c0_1, %c0_2] : memref<8x256xf32, #tpu.memory_space<vmem>>, vector<4x16xf32>
    %c0_3 = arith.constant 0 : index
    %c21 = arith.constant 21 : index
    %3 = vector.load %arg3[%c0_3, %c21] : memref<4x440xf32, #tpu.memory_space<vmem>>, vector<4x16xf32>
    tpu.vector_store %arg3[%c0_3, %c21], %2 {strides = array<i32>} : memref<4x440xf32, #tpu.memory_space<vmem>>, vector<4x16xf32>,
    %c0_4 = arith.constant 0 : index
    %c16 = arith.constant 16 : index
    %4 = vector.load %arg0[%c0_4, %c16] : memref<8x256xf32, #tpu.memory_space<vmem>>, vector<4x16xf32>
    %c0_5 = arith.constant 0 : index
    %c41 = arith.constant 41 : index
    %5 = vector.load %arg3[%c0_5, %c41] : memref<4x440xf32, #tpu.memory_space<vmem>>, vector<4x16xf32>
    tpu.vector_store %arg3[%c0_5, %c41], %4 {strides = array<i32>} : memref<4x440xf32, #tpu.memory_space<vmem>>, vector<4x16xf32>,
    %c0_6 = arith.constant 0 : index
    %c32 = arith.constant 32 : index
    %6 = vector.load %arg0[%c0_6, %c32] : memref<8x256xf32, #tpu.memory_space<vmem>>, vector<4x16xf32>
    %c0_7 = arith.constant 0 : index
    %c61 = arith.constant 61 : index
    %7 = vector.load %arg3[%c0_7, %c61] : memref<4x440xf32, #tpu.memory_space<vmem>>, vector<4x16xf32>
    tpu.vector_store %arg3[%c0_7, %c61], %6 {strides = array<i32>} : memref<4x440xf32, #tpu.memory_space<vmem>>, vector<4x16xf32>,
    %c0_8 = arith.constant 0 : index
    %c48 = arith.constant 48 : index
    %8 = vector.load %arg0[%c0_8, %c48] : memref<8x256xf32, #tpu.memory_space<vmem>>, vector<4x16xf32>
    %c0_9 = arith.constant 0 : index
    %c81 = arith.constant 81 : index
    %9 = vector.load %arg3[%c0_9, %c81] : memref<4x440xf32, #tpu.memory_space<vmem>>, vector<4x16xf32>
    tpu.vector_store %arg3[%c0_9, %c81], %8 {strides = array<i32>} : memref<4x440xf32, #tpu.memory_space<vmem>>, vector<4x16xf32>,
    %c0_10 = arith.constant 0 : index
    %c64 = arith.constant 64 : index
    %10 = vector.load %arg0[%c0_10, %c64] : memref<8x256xf32, #tpu.memory_space<vmem>>, vector<4x16xf32>
    %c0_11 = arith.constant 0 : index
    %c101 = arith.constant 101 : index
    %11 = vector.load %arg3[%c0_11, %c101] : memref<4x440xf32, #tpu.memory_space<vmem>>, vector<4x16xf32>
    tpu.vector_store %arg3[%c0_11, %c101], %10 {strides = array<i32>} : memref<4x440xf32, #tpu.memory_space<vmem>>, vector<4x16xf32>,
    %c0_12 = arith.constant 0 : index
    %c80 = arith.constant 80 : index
    %12 = vector.load %arg0[%c0_12, %c80] : memref<8x256xf32, #tpu.memory_space<vmem>>, vector<4x16xf32>
    %c0_13 = arith.constant 0 : index
    %c121 = arith.constant 121 : index
    %13 = vector.load %arg3[%c0_13, %c121] : memref<4x440xf32, #tpu.memory_space<vmem>>, vector<4x16xf32>
    tpu.vector_store %arg3[%c0_13, %c121], %12 {strides = array<i32>} : memref<4x440xf32, #tpu.memory_space<vmem>>, vector<4x16xf32>,
    %c0_14 = arith.constant 0 : index
    %c96 = arith.constant 96 : index
    %14 = vector.load %arg0[%c0_14, %c96] : memref<8x256xf32, #tpu.memory_space<vmem>>, vector<4x16xf32>
    %c0_15 = arith.constant 0 : index
    %c141 = arith.constant 141 : index
    %15 = vector.load %arg3[%c0_15, %c141] : memref<4x440xf32, #tpu.memory_space<vmem>>, vector<4x16xf32>
    tpu.vector_store %arg3[%c0_15, %c141], %14 {strides = array<i32>} : memref<4x440xf32, #tpu.memory_space<vmem>>, vector<4x16xf32>,
    %c0_16 = arith.constant 0 : index
    %c112 = arith.constant 112 : index
    %16 = vector.load %arg0[%c0_16, %c112] : memref<8x256xf32, #tpu.memory_space<vmem>>, vector<4x16xf32>
    %c0_17 = arith.constant 0 : index
    %c161 = arith.constant 161 : index
    %17 = vector.load %arg3[%c0_17, %c161] : memref<4x440xf32, #tpu.memory_space<vmem>>, vector<4x16xf32>
    tpu.vector_store %arg3[%c0_17, %c161], %16 {strides = array<i32>} : memref<4x440xf32, #tpu.memory_space<vmem>>, vector<4x16xf32>,
    %c0_18 = arith.constant 0 : index
    %c128 = arith.constant 128 : index
    %18 = vector.load %arg0[%c0_18, %c128] : memref<8x256xf32, #tpu.memory_space<vmem>>, vector<4x16xf32>
    %c0_19 = arith.constant 0 : index
    %c181 = arith.constant 181 : index
    %19 = vector.load %arg3[%c0_19, %c181] : memref<4x440xf32, #tpu.memory_space<vmem>>, vector<4x16xf32>
    tpu.vector_store %arg3[%c0_19, %c181], %18 {strides = array<i32>} : memref<4x440xf32, #tpu.memory_space<vmem>>, vector<4x16xf32>,
    %c0_20 = arith.constant 0 : index
    %c144 = arith.constant 144 : index
    %20 = vector.load %arg0[%c0_20, %c144] : memref<8x256xf32, #tpu.memory_space<vmem>>, vector<4x16xf32>
    %c0_21 = arith.constant 0 : index
    %c201 = arith.constant 201 : index
    %21 = vector.load %arg3[%c0_21, %c201] : memref<4x440xf32, #tpu.memory_space<vmem>>, vector<4x16xf32>
    tpu.vector_store %arg3[%c0_21, %c201], %20 {strides = array<i32>} : memref<4x440xf32, #tpu.memory_space<vmem>>, vector<4x16xf32>,
    %c0_22 = arith.constant 0 : index
    %c160 = arith.constant 160 : index
    %22 = vector.load %arg0[%c0_22, %c160] : memref<8x256xf32, #tpu.memory_space<vmem>>, vector<4x16xf32>
    %c0_23 = arith.constant 0 : index
    %c221 = arith.constant 221 : index
    %23 = vector.load %arg3[%c0_23, %c221] : memref<4x440xf32, #tpu.memory_space<vmem>>, vector<4x16xf32>
    tpu.vector_store %arg3[%c0_23, %c221], %22 {strides = array<i32>} : memref<4x440xf32, #tpu.memory_space<vmem>>, vector<4x16xf32>,
    %c0_24 = arith.constant 0 : index
    %c176 = arith.constant 176 : index
    %24 = vector.load %arg0[%c0_24, %c176] : memref<8x256xf32, #tpu.memory_space<vmem>>, vector<4x16xf32>
    %c0_25 = arith.constant 0 : index
    %c241 = arith.constant 241 : index
    %25 = vector.load %arg3[%c0_25, %c241] : memref<4x440xf32, #tpu.memory_space<vmem>>, vector<4x16xf32>
    tpu.vector_store %arg3[%c0_25, %c241], %24 {strides = array<i32>} : memref<4x440xf32, #tpu.memory_space<vmem>>, vector<4x16xf32>,
    %c0_26 = arith.constant 0 : index
    %c192 = arith.constant 192 : index
    %26 = vector.load %arg0[%c0_26, %c192] : memref<8x256xf32, #tpu.memory_space<vmem>>, vector<4x16xf32>
    %c0_27 = arith.constant 0 : index
    %c261 = arith.constant 261 : index
    %27 = vector.load %arg3[%c0_27, %c261] : memref<4x440xf32, #tpu.memory_space<vmem>>, vector<4x16xf32>
    tpu.vector_store %arg3[%c0_27, %c261], %26 {strides = array<i32>} : memref<4x440xf32, #tpu.memory_space<vmem>>, vector<4x16xf32>,
    %c0_28 = arith.constant 0 : index
    %c208 = arith.constant 208 : index
    %28 = vector.load %arg0[%c0_28, %c208] : memref<8x256xf32, #tpu.memory_space<vmem>>, vector<4x16xf32>
    %c0_29 = arith.constant 0 : index
    %c281 = arith.constant 281 : index
    %29 = vector.load %arg3[%c0_29, %c281] : memref<4x440xf32, #tpu.memory_space<vmem>>, vector<4x16xf32>
    tpu.vector_store %arg3[%c0_29, %c281], %28 {strides = array<i32>} : memref<4x440xf32, #tpu.memory_space<vmem>>, vector<4x16xf32>,
    %c0_30 = arith.constant 0 : index
    %c224 = arith.constant 224 : index
    %30 = vector.load %arg0[%c0_30, %c224] : memref<8x256xf32, #tpu.memory_space<vmem>>, vector<4x16xf32>
    %c0_31 = arith.constant 0 : index
    %c301 = arith.constant 301 : index
    %31 = vector.load %arg3[%c0_31, %c301] : memref<4x440xf32, #tpu.memory_space<vmem>>, vector<4x16xf32>
    tpu.vector_store %arg3[%c0_31, %c301], %30 {strides = array<i32>} : memref<4x440xf32, #tpu.memory_space<vmem>>, vector<4x16xf32>,
    %c0_32 = arith.constant 0 : index
    %c240 = arith.constant 240 : index
    %32 = vector.load %arg0[%c0_32, %c240] : memref<8x256xf32, #tpu.memory_space<vmem>>, vector<4x16xf32>
    %c0_33 = arith.constant 0 : index
    %c321 = arith.constant 321 : index
    %33 = vector.load %arg3[%c0_33, %c321] : memref<4x440xf32, #tpu.memory_space<vmem>>, vector<4x16xf32>
    tpu.vector_store %arg3[%c0_33, %c321], %32 {strides = array<i32>} : memref<4x440xf32, #tpu.memory_space<vmem>>, vector<4x16xf32>,
    %cst_34 = arith.constant 0.000000e+00 : f32
    %34 = vector.broadcast %cst_34 : f32 to vector<40x384xf32>
    %c0_35 = arith.constant 0 : index
    %c0_36 = arith.constant 0 : index
    %35 = vector.load %arg4[%c0_35, %c0_36] : memref<40x384xf32, #tpu.memory_space<vmem>>, vector<40x384xf32>
    tpu.vector_store %arg4[%c0_35, %c0_36], %34 {strides = array<i32>} : memref<40x384xf32, #tpu.memory_space<vmem>>, vector<40x384xf32>,
    %c0_37 = arith.constant 0 : index
    %c0_38 = arith.constant 0 : index
    %36 = vector.load %arg3[%c0_37, %c0_38] : memref<4x440xf32, #tpu.memory_space<vmem>>, vector<4x384xf32>
    %c0_39 = arith.constant 0 : index
    %c0_40 = arith.constant 0 : index
    %37 = vector.load %arg4[%c0_39, %c0_40] : memref<40x384xf32, #tpu.memory_space<vmem>>, vector<4x384xf32>
    tpu.vector_store %arg4[%c0_39, %c0_40], %36 {strides = array<i32>} : memref<40x384xf32, #tpu.memory_space<vmem>>, vector<4x384xf32>,
    %c0_41 = arith.constant 0 : index
    %c1 = arith.constant 1 : index
    %38 = vector.load %arg3[%c0_41, %c1] : memref<4x440xf32, #tpu.memory_space<vmem>>, vector<4x384xf32>
    %c4 = arith.constant 4 : index
    %c0_42 = arith.constant 0 : index
    %39 = vector.load %arg4[%c4, %c0_42] : memref<40x384xf32, #tpu.memory_space<vmem>>, vector<4x384xf32>
    tpu.vector_store %arg4[%c4, %c0_42], %38 {strides = array<i32>} : memref<40x384xf32, #tpu.memory_space<vmem>>, vector<4x384xf32>,
    %c0_43 = arith.constant 0 : index
    %c2 = arith.constant 2 : index
    %40 = vector.load %arg3[%c0_43, %c2] : memref<4x440xf32, #tpu.memory_space<vmem>>, vector<4x384xf32>
    %c8 = arith.constant 8 : index
    %c0_44 = arith.constant 0 : index
    %41 = vector.load %arg4[%c8, %c0_44] : memref<40x384xf32, #tpu.memory_space<vmem>>, vector<4x384xf32>
    tpu.vector_store %arg4[%c8, %c0_44], %40 {strides = array<i32>} : memref<40x384xf32, #tpu.memory_space<vmem>>, vector<4x384xf32>,
    %c0_45 = arith.constant 0 : index
    %c20 = arith.constant 20 : index
    %42 = vector.load %arg3[%c0_45, %c20] : memref<4x440xf32, #tpu.memory_space<vmem>>, vector<4x384xf32>
    %c12 = arith.constant 12 : index
    %c0_46 = arith.constant 0 : index
    %43 = vector.load %arg4[%c12, %c0_46] : memref<40x384xf32, #tpu.memory_space<vmem>>, vector<4x384xf32>
    tpu.vector_store %arg4[%c12, %c0_46], %42 {strides = array<i32>} : memref<40x384xf32, #tpu.memory_space<vmem>>, vector<4x384xf32>,
    %c0_47 = arith.constant 0 : index
    %c21_48 = arith.constant 21 : index
    %44 = vector.load %arg3[%c0_47, %c21_48] : memref<4x440xf32, #tpu.memory_space<vmem>>, vector<4x384xf32>
    %c16_49 = arith.constant 16 : index
    %c0_50 = arith.constant 0 : index
    %45 = vector.load %arg4[%c16_49, %c0_50] : memref<40x384xf32, #tpu.memory_space<vmem>>, vector<4x384xf32>
    tpu.vector_store %arg4[%c16_49, %c0_50], %44 {strides = array<i32>} : memref<40x384xf32, #tpu.memory_space<vmem>>, vector<4x384xf32>,
    %c0_51 = arith.constant 0 : index
    %c22 = arith.constant 22 : index
    %46 = vector.load %arg3[%c0_51, %c22] : memref<4x440xf32, #tpu.memory_space<vmem>>, vector<4x384xf32>
    %c20_52 = arith.constant 20 : index
    %c0_53 = arith.constant 0 : index
    %47 = vector.load %arg4[%c20_52, %c0_53] : memref<40x384xf32, #tpu.memory_space<vmem>>, vector<4x384xf32>
    tpu.vector_store %arg4[%c20_52, %c0_53], %46 {strides = array<i32>} : memref<40x384xf32, #tpu.memory_space<vmem>>, vector<4x384xf32>,
    %c0_54 = arith.constant 0 : index
    %c40 = arith.constant 40 : index
    %48 = vector.load %arg3[%c0_54, %c40] : memref<4x440xf32, #tpu.memory_space<vmem>>, vector<4x384xf32>
    %c24 = arith.constant 24 : index
    %c0_55 = arith.constant 0 : index
    %49 = vector.load %arg4[%c24, %c0_55] : memref<40x384xf32, #tpu.memory_space<vmem>>, vector<4x384xf32>
    tpu.vector_store %arg4[%c24, %c0_55], %48 {strides = array<i32>} : memref<40x384xf32, #tpu.memory_space<vmem>>, vector<4x384xf32>,
    %c0_56 = arith.constant 0 : index
    %c41_57 = arith.constant 41 : index
    %50 = vector.load %arg3[%c0_56, %c41_57] : memref<4x440xf32, #tpu.memory_space<vmem>>, vector<4x384xf32>
    %c28 = arith.constant 28 : index
    %c0_58 = arith.constant 0 : index
    %51 = vector.load %arg4[%c28, %c0_58] : memref<40x384xf32, #tpu.memory_space<vmem>>, vector<4x384xf32>
    tpu.vector_store %arg4[%c28, %c0_58], %50 {strides = array<i32>} : memref<40x384xf32, #tpu.memory_space<vmem>>, vector<4x384xf32>,
    %c0_59 = arith.constant 0 : index
    %c42 = arith.constant 42 : index
    %52 = vector.load %arg3[%c0_59, %c42] : memref<4x440xf32, #tpu.memory_space<vmem>>, vector<4x384xf32>
    %c32_60 = arith.constant 32 : index
    %c0_61 = arith.constant 0 : index
    %53 = vector.load %arg4[%c32_60, %c0_61] : memref<40x384xf32, #tpu.memory_space<vmem>>, vector<4x384xf32>
    tpu.vector_store %arg4[%c32_60, %c0_61], %52 {strides = array<i32>} : memref<40x384xf32, #tpu.memory_space<vmem>>, vector<4x384xf32>,
    %c0_62 = arith.constant 0 : index
    %c0_63 = arith.constant 0 : index
    %54 = vector.load %arg1[%c0_62, %c0_63] : memref<64x384xf32, #tpu.memory_space<vmem>>, vector<16x40xf32>
    %c16_64 = arith.constant 16 : index
    %c0_65 = arith.constant 0 : index
    %55 = vector.load %arg1[%c16_64, %c0_65] : memref<64x384xf32, #tpu.memory_space<vmem>>, vector<16x384xf32>
    %c32_66 = arith.constant 32 : index
    %c0_67 = arith.constant 0 : index
    %56 = vector.load %arg1[%c32_66, %c0_67] : memref<64x384xf32, #tpu.memory_space<vmem>>, vector<16x128xf32>
    %c48_68 = arith.constant 48 : index
    %c0_69 = arith.constant 0 : index
    %57 = vector.load %arg1[%c48_68, %c0_69] : memref<64x384xf32, #tpu.memory_space<vmem>>, vector<1x384xf32>
    %c56 = arith.constant 56 : index
    %c0_70 = arith.constant 0 : index
    %58 = vector.load %arg1[%c56, %c0_70] : memref<64x384xf32, #tpu.memory_space<vmem>>, vector<1x128xf32>
    %c0_71 = arith.constant 0 : index
    %c0_72 = arith.constant 0 : index
    %59 = vector.load %arg4[%c0_71, %c0_72] : memref<40x384xf32, #tpu.memory_space<vmem>>, vector<40x384xf32>
    %cst_73 = arith.constant dense<0.000000e+00> : vector<16x384xf32>
    %60 = tpu.matmul %54, %59, %cst_73 {dimension_numbers = #tpu.dot_dimension_numbers<[1], [0], [0], [1], [0, 0, 1, 1], [], []>} : vector<16x40xf32>, vector<40x384xf32>, vector<16x384xf32> -> vector<16x384xf32>
    %61 = arith.addf %60, %55 : vector<16x384xf32>
    %cst_74 = arith.constant 0.000000e+00 : f32
    %62 = vector.broadcast %cst_74 : f32 to vector<16x384xf32>
    %63 = arith.maximumf %61, %62 : vector<16x384xf32>
    %64 = vector.broadcast %57 : vector<1x384xf32> to vector<16x384xf32>
    %65 = arith.mulf %63, %64 : vector<16x384xf32>
    %cst_75 = arith.constant dense<0.000000e+00> : vector<16xf32>
    %66 = vector.multi_reduction <add>, %65, %cst_75 [1] : vector<16x384xf32> to vector<16xf32>
    %67 = vector.shape_cast %66 : vector<16xf32> to vector<16x1xf32>
    %68 = vector.broadcast %67 : vector<16x1xf32> to vector<16x128xf32>
    %69 = arith.mulf %68, %56 : vector<16x128xf32>
    %cst_76 = arith.constant dense<0.000000e+00> : vector<128xf32>
    %70 = vector.multi_reduction <add>, %69, %cst_76 [0] : vector<16x128xf32> to vector<128xf32>
    %71 = vector.shape_cast %70 : vector<128xf32> to vector<1x128xf32>
    %72 = arith.addf %71, %58 : vector<1x128xf32>
    %c0_77 = arith.constant 0 : index
    %c0_78 = arith.constant 0 : index
    %73 = vector.load %arg2[%c0_77, %c0_78] : memref<1x128xf32, #tpu.memory_space<vmem>>, vector<1x128xf32>
    tpu.vector_store %arg2[%c0_77, %c0_78], %72 {strides = array<i32>} : memref<1x128xf32, #tpu.memory_space<vmem>>, vector<1x128xf32>,
    return
  }
}

</mosaic_0001>

<llo_original>
// kernel: newnet_forward.1
$region0: #{newnet_forward.1}
  #allocation0 [shape = 'u32[]', space=smem, size = 0x4, offset = 0x4, fixed_abs, tag = 'smem constant byte address 0x4 - core index']
  #allocation1 [shape = 'u32[144,128]{1,0:T(1,128)}', space=vmem, size = 0x12000, scoped, tag = 'internal scratch']
  #allocation2 [shape = 'f32[4,440]{1,0:T(4,128)}', space=vmem, size = 0x2000, scoped, tag = 'scratch operand']
  #allocation3 [shape = 'f32[40,384]{1,0:T(8,128)}', space=vmem, size = 0xf000, scoped, tag = 'scratch operand']
  %s0 = inlined_call_operand.vmem [shape: f32[8,256], index: 0, kind: input, shape index: {}]
  %s1 = inlined_call_operand.hbm [shape: f32[64,384], index: 1, kind: input, shape index: {}]
  %s2 = inlined_call_operand.vmem [shape: f32[1,128], index: 2, kind: output, shape index: {}]
  %s3 = sld [smem:[#allocation0]]
  $region22: #{newnet_forward.1} parent=0
    _
  %s5 = ssub.s32 1, %s3
  %s6 = scalar_select 0, %s5, %s3
  $region1: #{newnet_forward.1} parent=0
    #allocation4 [shape = 'u8[98304]{0}', space=vmem, size = 0x18000, scoped, tag = 'input window, operand 1, single buffered']
    #allocation5 [shape = 's32[1]{0}', space=sflag, size = 0x4, scoped, tag = 'scoped memory for newnet_forward.1']
    %7 = vsyncpa [#allocation5], 0
    // Predicated region
    $region2: #{newnet_forward.1} parent=1 // pred_check
      _
    $region3: #{newnet_forward.1} parent=1 // pred_check_branch
      %9 = sbr.rel (0) target = $region5
    $region4: #{newnet_forward.1} parent=1 // pred_region
      _
    $region5: #{newnet_forward.1} parent=1 // pred_fallthru
      _
    // Predicated region
    $region6: #{newnet_forward.1} parent=1 // pred_check
      _
    $region7: #{newnet_forward.1} parent=1 // pred_check_branch
      %11 = sbr.rel (0) target = $region9
    $region8: #{newnet_forward.1} parent=1 // pred_region
      %s13 = ssub.s32 3072, 3072
      %14 = vsyncadd [#allocation5], %s13
      %s15 = sshll.u32 [#allocation4], 4
      %s16 = int_to_ptr.vmem [resolvable:$true] %s15
      %21 = dma.hbm_to_vmem [thread:$0]  %s1, 3072, %s16, [#allocation5], 384, 384, 24
    $region9: #{newnet_forward.1} parent=1 // pred_fallthru
      _
    // Predicated region
    $region10: #{newnet_forward.1} parent=1 // pred_check
      _
    $region11: #{newnet_forward.1} parent=1 // pred_check_branch
      %23 = sbr.rel (0) target = $region13
    $region12: #{newnet_forward.1} parent=1 // pred_region
      %24 = dma.done [#allocation5], 3072
    $region13: #{newnet_forward.1} parent=1 // pred_fallthru
      _
    %25 = vst [vmem:[#allocation2] sm:$0xff] 0.0
    %vm26 = vcmask 1043456
    %vm27 = vcmask 457732
    %vm28 = vmor %vm27, %vm26
    %29 = vst.msk [vmem:[#allocation2 + $0x8] sm:$0xff] %vm28, 0.0
    %v30 = vld [vmem:[%s0] sm:$0xf]
    %32 = vrot.lane.b32.xlu0 %v30, 21
    %v33 = vpop.permute.xlu0 %32
    %vm35 = vcmask 298152
    %36 = vst.msk [vmem:[#allocation2] sm:$0xf] %vm35, %v33
    %v37 = vld [vmem:[%s0] sm:$0xf]
    %39 = vrot.lane.b32.xlu0 %v37, 25
    %v40 = vpop.permute.xlu0 %39
    %vm42 = vcmask 462152
    %43 = vst.msk [vmem:[#allocation2] sm:$0xf] %vm42, %v40
    %v44 = vld [vmem:[%s0] sm:$0xf]
    %46 = vrot.lane.b32.xlu0 %v44, 29
    %v47 = vpop.permute.xlu0 %46
    %vm49 = vcmask 626152
    %50 = vst.msk [vmem:[#allocation2] sm:$0xf] %vm49, %v47
    %v51 = vld [vmem:[%s0] sm:$0xf]
    %53 = vrot.lane.b32.xlu0 %v51, 33
    %v54 = vpop.permute.xlu0 %53
    %vm56 = vcmask 790152
    %57 = vst.msk [vmem:[#allocation2] sm:$0xf] %vm56, %v54
    %v58 = vld [vmem:[%s0] sm:$0xf]
    %60 = vrot.lane.b32.xlu0 %v58, 37
    %v61 = vpop.permute.xlu0 %60
    %vm63 = vcmask 954152
    %64 = vst.msk [vmem:[#allocation2] sm:$0xf] %vm63, %v61
    %v65 = vld [vmem:[%s0] sm:$0xf]
    %67 = vrot.lane.b32.xlu0 %v65, 41
    %v68 = vpop.permute.xlu0 %67
    %v69 = vrot.slane %v68, 4
    %vm70 = vcmask 334848
    %v71 = vsel %vm70, %v69, %v68
    %vm73 = vcmask 1044424
    %vm74 = vcmask 72708
    %vm75 = vmor %vm74, %vm73
    %76 = vst.msk [vmem:[#allocation2] sm:$0xff] %vm75, %v71
    %v77 = vld [vmem:[%s0] sm:$0xf]
    %79 = vrot.lane.b32.xlu0 %v77, 45
    %v80 = vpop.permute.xlu0 %79
    %vm82 = vcmask 232552
    %83 = vst.msk [vmem:[#allocation2 + $0x4] sm:$0xf] %vm82, %v80
    %v84 = vld [vmem:[%s0] sm:$0xf]
    %86 = vrot.lane.b32.xlu0 %v84, 49
    %v87 = vpop.permute.xlu0 %86
    %vm89 = vcmask 396552
    %90 = vst.msk [vmem:[#allocation2 + $0x4] sm:$0xf] %vm89, %v87
    %v91 = vld [vmem:[%s0 + $0x8] sm:$0xf]
    %93 = vrot.lane.b32.xlu0 %v91, 53
    %v94 = vpop.permute.xlu0 %93
    %vm96 = vcmask 560552
    %97 = vst.msk [vmem:[#allocation2 + $0x4] sm:$0xf] %vm96, %v94
    %v98 = vld [vmem:[%s0 + $0x8] sm:$0xf]
    %100 = vrot.lane.b32.xlu0 %v98, 57
    %v101 = vpop.permute.xlu0 %100
    %vm103 = vcmask 724552
    %104 = vst.msk [vmem:[#allocation2 + $0x4] sm:$0xf] %vm103, %v101
    %v105 = vld [vmem:[%s0 + $0x8] sm:$0xf]
    %107 = vrot.lane.b32.xlu0 %v105, 61
    %v108 = vpop.permute.xlu0 %107
    %vm110 = vcmask 888552
    %111 = vst.msk [vmem:[#allocation2 + $0x4] sm:$0xf] %vm110, %v108
    %v112 = vld [vmem:[%s0 + $0x8] sm:$0xf]
    %114 = vrot.lane.b32.xlu0 %v112, 65
    %v115 = vpop.permute.xlu0 %114
    %v116 = vrot.slane %v115, 4
    %vm117 = vcmask 531456
    %v118 = vsel %vm117, %v116, %v115
    %vm120 = vcmask 1044360
    %vm121 = vcmask 7172
    %vm122 = vmor %vm121, %vm120
    %123 = vst.msk [vmem:[#allocation2 + $0x4] sm:$0xff] %vm122, %v118
    %v124 = vld [vmem:[%s0 + $0x8] sm:$0xf]
    %126 = vrot.lane.b32.xlu0 %v124, 69
    %v127 = vpop.permute.xlu0 %126
    %vm129 = vcmask 166952
    %130 = vst.msk [vmem:[#allocation2 + $0x8] sm:$0xf] %vm129, %v127
    %v131 = vld [vmem:[%s0 + $0x8] sm:$0xf]
    %133 = vrot.lane.b32.xlu0 %v131, 73
    %v134 = vpop.permute.xlu0 %133
    %vm136 = vcmask 330952
    %137 = vst.msk [vmem:[#allocation2 + $0x8] sm:$0xf] %vm136, %v134
    %v138 = vld [vmem:[%s0 + $0x8] sm:$0xf]
    %140 = vrot.lane.b32.xlu0 %v138, 77
    %v141 = vpop.permute.xlu0 %140
    %vm143 = vcmask 494952
    %144 = vst.msk [vmem:[#allocation2 + $0x8] sm:$0xf] %vm143, %v141
    %v145 = vld [vmem:[%s0 + $0x8] sm:$0xf]
    %147 = vrot.lane.b32.xlu0 %v145, 81
    %v148 = vpop.permute.xlu0 %147
    %vm150 = vcmask 658952
    %151 = vst.msk [vmem:[#allocation2 + $0x8] sm:$0xf] %vm150, %v148
    %152 = vst [vmem:[#allocation3] sm:$0xff] 0.0
    %153 = vst [vmem:[#allocation3 + $0x8] sm:$0xff] 0.0
    %154 = vst [vmem:[#allocation3 + $0x10] sm:$0xff] 0.0
    %155 = vst [vmem:[#allocation3 + $0x18] sm:$0xff] 0.0
    %156 = vst [vmem:[#allocation3 + $0x20] sm:$0xff] 0.0
    %157 = vst [vmem:[#allocation3 + $0x28] sm:$0xff] 0.0
    %158 = vst [vmem:[#allocation3 + $0x30] sm:$0xff] 0.0
    %159 = vst [vmem:[#allocation3 + $0x38] sm:$0xff] 0.0
    %160 = vst [vmem:[#allocation3 + $0x40] sm:$0xff] 0.0
    %161 = vst [vmem:[#allocation3 + $0x48] sm:$0xff] 0.0
    %162 = vst [vmem:[#allocation3 + $0x50] sm:$0xff] 0.0
    %163 = vst [vmem:[#allocation3 + $0x58] sm:$0xff] 0.0
    %164 = vst [vmem:[#allocation3 + $0x60] sm:$0xff] 0.0
    %165 = vst [vmem:[#allocation3 + $0x68] sm:$0xff] 0.0
    %166 = vst [vmem:[#allocation3 + $0x70] sm:$0xff] 0.0
    %v167 = vld [vmem:[#allocation2] sm:$0xff]
    %v168 = vld [vmem:[#allocation2 + $0x8] sm:$0xf]
    %v170 = vcombine.high %v167, %v167
    %172 = vst [vmem:[#allocation3] sm:$0xf] %v167
    %173 = vst [vmem:[#allocation3 + $0x8] sm:$0xf] %v170
    %174 = vst [vmem:[#allocation3 + $0x10] sm:$0xf] %v168
    %v175 = vld [vmem:[#allocation2] sm:$0xff]
    %v176 = vld [vmem:[#allocation2 + $0x8] sm:$0xff]
    %v179 = vcombine.low %v175, %v175
    %v180 = vcombine.low %v176, %v176
    %181 = vrot.lane.b32.xlu0 %v179, 127
    %v182 = vpop.permute.xlu0 %181
    %183 = vrot.lane.b32.xlu0 %v175, 127
    %v184 = vpop.permute.xlu0 %183
    %185 = vrot.lane.b32.xlu0 %v180, 127
    %v186 = vpop.permute.xlu0 %185
    %187 = vrot.lane.b32.xlu0 %v176, 127
    %v188 = vpop.permute.xlu0 %187
    %vm189 = vcmask 1039360
    %v190 = vsel %vm189, %v182, %v184
    %v191 = vsel %vm189, %v184, %v186
    %v192 = vsel %vm189, %v186, %v188
    %196 = vst [vmem:[#allocation3] sm:$0xf0] %v190
    %197 = vst [vmem:[#allocation3 + $0x8] sm:$0xf0] %v191
    %198 = vst [vmem:[#allocation3 + $0x10] sm:$0xf0] %v192
    %v199 = vld [vmem:[#allocation2] sm:$0xff]
    %v200 = vld [vmem:[#allocation2 + $0x8] sm:$0xff]
    %v203 = vcombine.high %v199, %v199
    %v204 = vcombine.high %v200, %v200
    %205 = vrot.lane.b32.xlu0 %v199, 126
    %v206 = vpop.permute.xlu0 %205
    %207 = vrot.lane.b32.xlu0 %v203, 126
    %v208 = vpop.permute.xlu0 %207
    %209 = vrot.lane.b32.xlu0 %v200, 126
    %v210 = vpop.permute.xlu0 %209
    %211 = vrot.lane.b32.xlu0 %v204, 126
    %v212 = vpop.permute.xlu0 %211
    %vm213 = vcmask 1031168
    %v214 = vsel %vm213, %v206, %v208
    %v215 = vsel %vm213, %v208, %v210
    %v216 = vsel %vm213, %v210, %v212
    %220 = vst [vmem:[#allocation3 + $0x18] sm:$0xf] %v214
    %221 = vst [vmem:[#allocation3 + $0x20] sm:$0xf] %v215
    %222 = vst [vmem:[#allocation3 + $0x28] sm:$0xf] %v216
    %v223 = vld [vmem:[#allocation2] sm:$0xff]
    %v224 = vld [vmem:[#allocation2 + $0x8] sm:$0xff]
    %v227 = vcombine.low %v223, %v223
    %v228 = vcombine.low %v224, %v224
    %229 = vrot.lane.b32.xlu0 %v227, 108
    %v230 = vpop.permute.xlu0 %229
    %231 = vrot.lane.b32.xlu0 %v223, 108
    %v232 = vpop.permute.xlu0 %231
    %233 = vrot.lane.b32.xlu0 %v228, 108
    %v234 = vpop.permute.xlu0 %233
    %235 = vrot.lane.b32.xlu0 %v224, 108
    %v236 = vpop.permute.xlu0 %235
    %vm237 = vcmask 883712
    %v238 = vsel %vm237, %v230, %v232
    %v239 = vsel %vm237, %v232, %v234
    %v240 = vsel %vm237, %v234, %v236
    %244 = vst [vmem:[#allocation3 + $0x18] sm:$0xf0] %v238
    %245 = vst [vmem:[#allocation3 + $0x20] sm:$0xf0] %v239
    %246 = vst [vmem:[#allocation3 + $0x28] sm:$0xf0] %v240
    %v247 = vld [vmem:[#allocation2] sm:$0xff]
    %v248 = vld [vmem:[#allocation2 + $0x8] sm:$0xff]
    %v251 = vcombine.high %v247, %v247
    %v252 = vcombine.high %v248, %v248
    %253 = vrot.lane.b32.xlu0 %v247, 107
    %v254 = vpop.permute.xlu0 %253
    %255 = vrot.lane.b32.xlu0 %v251, 107
    %v256 = vpop.permute.xlu0 %255
    %257 = vrot.lane.b32.xlu0 %v248, 107
    %v258 = vpop.permute.xlu0 %257
    %259 = vrot.lane.b32.xlu0 %v252, 107
    %v260 = vpop.permute.xlu0 %259
    %vm261 = vcmask 875520
    %v262 = vsel %vm261, %v254, %v256
    %v263 = vsel %vm261, %v256, %v258
    %v264 = vsel %vm261, %v258, %v260
    %268 = vst [vmem:[#allocation3 + $0x30] sm:$0xf] %v262
    %269 = vst [vmem:[#allocation3 + $0x38] sm:$0xf] %v263
    %270 = vst [vmem:[#allocation3 + $0x40] sm:$0xf] %v264
    %v271 = vld [vmem:[#allocation2] sm:$0xff]
    %v272 = vld [vmem:[#allocation2 + $0x8] sm:$0xff]
    %v275 = vcombine.low %v271, %v271
    %v276 = vcombine.low %v272, %v272
    %277 = vrot.lane.b32.xlu0 %v275, 106
    %v278 = vpop.permute.xlu0 %277
    %279 = vrot.lane.b32.xlu0 %v271, 106
    %v280 = vpop.permute.xlu0 %279
    %281 = vrot.lane.b32.xlu0 %v276, 106
    %v282 = vpop.permute.xlu0 %281
    %283 = vrot.lane.b32.xlu0 %v272, 106
    %v284 = vpop.permute.xlu0 %283
    %vm285 = vcmask 867328
    %v286 = vsel %vm285, %v278, %v280
    %v287 = vsel %vm285, %v280, %v282
    %v288 = vsel %vm285, %v282, %v284
    %292 = vst [vmem:[#allocation3 + $0x30] sm:$0xf0] %v286
    %293 = vst [vmem:[#allocation3 + $0x38] sm:$0xf0] %v287
    %294 = vst [vmem:[#allocation3 + $0x40] sm:$0xf0] %v288
    %v295 = vld [vmem:[#allocation2] sm:$0xff]
    %v296 = vld [vmem:[#allocation2 + $0x8] sm:$0xff]
    %v299 = vcombine.high %v295, %v295
    %v300 = vcombine.high %v296, %v296
    %301 = vrot.lane.b32.xlu0 %v295, 88
    %v302 = vpop.permute.xlu0 %301
    %303 = vrot.lane.b32.xlu0 %v299, 88
    %v304 = vpop.permute.xlu0 %303
    %305 = vrot.lane.b32.xlu0 %v296, 88
    %v306 = vpop.permute.xlu0 %305
    %307 = vrot.lane.b32.xlu0 %v300, 88
    %v308 = vpop.permute.xlu0 %307
    %vm309 = vcmask 719872
    %v310 = vsel %vm309, %v302, %v304
    %v311 = vsel %vm309, %v304, %v306
    %v312 = vsel %vm309, %v306, %v308
    %316 = vst [vmem:[#allocation3 + $0x48] sm:$0xf] %v310
    %317 = vst [vmem:[#allocation3 + $0x50] sm:$0xf] %v311
    %318 = vst [vmem:[#allocation3 + $0x58] sm:$0xf] %v312
    %v319 = vld [vmem:[#allocation2] sm:$0xff]
    %v320 = vld [vmem:[#allocation2 + $0x8] sm:$0xff]
    %v323 = vcombine.low %v319, %v319
    %v324 = vcombine.low %v320, %v320
    %325 = vrot.lane.b32.xlu0 %v323, 87
    %v326 = vpop.permute.xlu0 %325
    %327 = vrot.lane.b32.xlu0 %v319, 87
    %v328 = vpop.permute.xlu0 %327
    %329 = vrot.lane.b32.xlu0 %v324, 87
    %v330 = vpop.permute.xlu0 %329
    %331 = vrot.lane.b32.xlu0 %v320, 87
    %v332 = vpop.permute.xlu0 %331
    %vm333 = vcmask 711680
    %v334 = vsel %vm333, %v326, %v328
    %v335 = vsel %vm333, %v328, %v330
    %v336 = vsel %vm333, %v330, %v332
    %340 = vst [vmem:[#allocation3 + $0x48] sm:$0xf0] %v334
    %341 = vst [vmem:[#allocation3 + $0x50] sm:$0xf0] %v335
    %342 = vst [vmem:[#allocation3 + $0x58] sm:$0xf0] %v336
    %v343 = vld [vmem:[#allocation2] sm:$0xff]
    %v344 = vld [vmem:[#allocation2 + $0x8] sm:$0xff]
    %v347 = vcombine.high %v343, %v343
    %v348 = vcombine.high %v344, %v344
    %349 = vrot.lane.b32.xlu0 %v343, 86
    %v350 = vpop.permute.xlu0 %349
    %351 = vrot.lane.b32.xlu0 %v347, 86
    %v352 = vpop.permute.xlu0 %351
    %353 = vrot.lane.b32.xlu0 %v344, 86
    %v354 = vpop.permute.xlu0 %353
    %355 = vrot.lane.b32.xlu0 %v348, 86
    %v356 = vpop.permute.xlu0 %355
    %vm357 = vcmask 703488
    %v358 = vsel %vm357, %v350, %v352
    %v359 = vsel %vm357, %v352, %v354
    %v360 = vsel %vm357, %v354, %v356
    %364 = vst [vmem:[#allocation3 + $0x60] sm:$0xf] %v358
    %365 = vst [vmem:[#allocation3 + $0x68] sm:$0xf] %v359
    %366 = vst [vmem:[#allocation3 + $0x70] sm:$0xf] %v360
    %v367 = vld [vmem:[#allocation4] sm:$0xff]
    %v368 = vld [vmem:[#allocation4 + $0x18] sm:$0xff]
    %v369 = vld [vmem:[#allocation4 + $0x30] sm:$0xff]
    %v370 = vld [vmem:[#allocation4 + $0x38] sm:$0xff]
    %v371 = vld [vmem:[#allocation4 + $0x40] sm:$0xff]
    %v372 = vld [vmem:[#allocation4 + $0x48] sm:$0xff]
    %v373 = vld [vmem:[#allocation4 + $0x50] sm:$0xff]
    %v374 = vld [vmem:[#allocation4 + $0x58] sm:$0xff]
    %v375 = vld [vmem:[#allocation4 + $0x60] sm:$0xff]
    %v376 = vld [vmem:[#allocation4 + $0x78] sm:$0xff]
    %s377 = scalar_lea.vmem [#allocation4], 144
    %v378 = vld [vmem:[%s377] ss:$8 sm:$0x7]
    %v379 = vld [vmem:[#allocation4 + $0xa8] ss:$0 sm:$0xff]
    %v380 = vld [vmem:[#allocation3] sm:$0xff]
    %v381 = vld [vmem:[#allocation3 + $0x8] sm:$0xff]
    %v382 = vld [vmem:[#allocation3 + $0x10] sm:$0xff]
    %v383 = vld [vmem:[#allocation3 + $0x18] sm:$0xff]
    %v384 = vld [vmem:[#allocation3 + $0x20] sm:$0xff]
    %v385 = vld [vmem:[#allocation3 + $0x28] sm:$0xff]
    %v386 = vld [vmem:[#allocation3 + $0x30] sm:$0xff]
    %v387 = vld [vmem:[#allocation3 + $0x38] sm:$0xff]
    %v388 = vld [vmem:[#allocation3 + $0x40] sm:$0xff]
    %v389 = vld [vmem:[#allocation3 + $0x48] sm:$0xff]
    %v390 = vld [vmem:[#allocation3 + $0x50] sm:$0xff]
    %v391 = vld [vmem:[#allocation3 + $0x58] sm:$0xff]
    %v392 = vld [vmem:[#allocation3 + $0x60] sm:$0xff]
    %v393 = vld [vmem:[#allocation3 + $0x68] sm:$0xff]
    %v394 = vld [vmem:[#allocation3 + $0x70] sm:$0xff]
    %vm395 = vcmask 326656
    %v397 = vsel %vm395, %v367, 0
    %v400 = vsel %vm395, %v368, 0
    %402 = vmatprep.subr.mxu0 %v381
    %403 = vmatpush1.msra.mxu0 %v380
    %404 = vmatprep.subr.mxu0 %v384
    %405 = vmatpush1.msra.mxu0 %v383
    %406 = vmatprep.subr.mxu0 %v387
    %407 = vmatpush1.msra.mxu0 %v386
    %408 = vmatprep.subr.mxu0 %v390
    %409 = vmatpush1.msra.mxu0 %v389
    %410 = vmatprep.subr.mxu0 %v393
    %411 = vmatpush1.msra.mxu0 %v392
    %412 = vmatprep.subr.mxu0 0.0
    %413 = vmatpush1.msra.mxu0 0.0
    %414 = vmatprep.subr.mxu0 0.0
    %415 = vmatpush1.msra.mxu0 0.0
    %416 = vmatprep.subr.mxu0 0.0
    %417 = vmatpush1.msra.mxu0 0.0
    %418 = vmatprep.subr.mxu0 0.0
    %419 = vmatpush1.msra.mxu0 0.0
    %420 = vmatprep.subr.mxu0 0.0
    %421 = vmatpush1.msra.mxu0 0.0
    %422 = vmatprep.subr.mxu0 0.0
    %423 = vmatpush1.msra.mxu0 0.0
    %424 = vmatprep.subr.mxu0 0.0
    %425 = vmatpush1.msra.mxu0 0.0
    %426 = vmatprep.subr.mxu0 0.0
    %427 = vmatpush1.msra.mxu0 0.0
    %428 = vmatprep.subr.mxu0 0.0
    %429 = vmatpush1.msra.mxu0 0.0
    %430 = vmatprep.subr.mxu0 0.0
    %431 = vmatpush1.msra.mxu0 0.0
    %432 = vmatprep.subr.mxu0 0.0
    %433 = vmatpush1.msra.mxu0 0.0
    %434 = vmatprep.subr.mxu0 0.0
    %435 = vmatpush1.msra.mxu0 0.0
    %436 = vmatprep.subr.mxu0 0.0
    %437 = vmatpush1.msra.mxu0 0.0
    %438 = vmatprep.subr.mxu0 0.0
    %439 = vmatpush1.msra.mxu0 0.0
    %440 = vmatprep.subr.mxu0 0.0
    %441 = vmatpush1.msra.mxu0 0.0
    %442 = vmatprep.subr.mxu0 0.0
    %443 = vmatpush1.msra.mxu0 0.0
    %444 = vmatprep.subr.mxu0 0.0
    %445 = vmatpush1.msra.mxu0 0.0
    %446 = vmatprep.subr.mxu0 0.0
    %447 = vmatpush1.msra.mxu0 0.0
    %448 = vmatprep.subr.mxu0 0.0
    %449 = vmatpush1.msra.mxu0 0.0
    %450 = vmatprep.subr.mxu0 0.0
    %451 = vmatpush1.msra.mxu0 0.0
    %452 = vmatprep.subr.mxu0 0.0
    %453 = vmatpush1.msra.mxu0 0.0
    %454 = vmatprep.subr.mxu0 0.0
    %455 = vmatpush1.msra.mxu0 0.0
    %456 = vmatprep.subr.mxu0 0.0
    %457 = vmatpush1.msra.mxu0 0.0
    %458 = vmatprep.subr.mxu0 0.0
    %459 = vmatpush1.msra.mxu0 0.0
    %460 = vmatprep.subr.mxu0 0.0
    %461 = vmatpush1.msra.mxu0 0.0
    %462 = vmatprep.subr.mxu0 0.0
    %463 = vmatpush1.msra.mxu0 0.0
    %464 = vmatprep.subr.mxu0 0.0
    %465 = vmatpush1.msra.mxu0 0.0
    %466 = vmatprep.mubr.f32.mxu0 0.0
    %467 = vmatmul.mubr.f32.gmra.mrb[0].mxu0 %v397
    %v468 = vpop.f32.mrb[0].mxu0
    %v469 = vadd.f32 %v369, %v468
    %v470 = vpop.f32.mrb[0].mxu0
    %v471 = vadd.f32 %v370, %v470
    %472 = vmatprep.mubr.f32.mxu0 0.0
    %473 = vmatmul.mubr.f32.gmra.mrb[0].mxu0 %v400
    %v474 = vpop.f32.mrb[0].mxu0
    %v475 = vadd.f32 %v372, %v474
    %v476 = vpop.f32.mrb[0].mxu0
    %v477 = vadd.f32 %v373, %v476
    %478 = vdwg.mxu0
    %479 = vmatprep.subr.mxu0 0.0
    %480 = vmatpush1.msra.mxu0 %v382
    %481 = vmatprep.subr.mxu0 0.0
    %482 = vmatpush1.msra.mxu0 %v385
    %483 = vmatprep.subr.mxu0 0.0
    %484 = vmatpush1.msra.mxu0 %v388
    %485 = vmatprep.subr.mxu0 0.0
    %486 = vmatpush1.msra.mxu0 %v391
    %487 = vmatprep.subr.mxu0 0.0
    %488 = vmatpush1.msra.mxu0 %v394
    %489 = vmatprep.subr.mxu0 0.0
    %490 = vmatpush1.msra.mxu0 0.0
    %491 = vmatprep.subr.mxu0 0.0
    %492 = vmatpush1.msra.mxu0 0.0
    %493 = vmatprep.subr.mxu0 0.0
    %494 = vmatpush1.msra.mxu0 0.0
    %495 = vmatprep.subr.mxu0 0.0
    %496 = vmatpush1.msra.mxu0 0.0
    %497 = vmatprep.subr.mxu0 0.0
    %498 = vmatpush1.msra.mxu0 0.0
    %499 = vmatprep.subr.mxu0 0.0
    %500 = vmatpush1.msra.mxu0 0.0
    %501 = vmatprep.subr.mxu0 0.0
    %502 = vmatpush1.msra.mxu0 0.0
    %503 = vmatprep.subr.mxu0 0.0
    %504 = vmatpush1.msra.mxu0 0.0
    %505 = vmatprep.subr.mxu0 0.0
    %506 = vmatpush1.msra.mxu0 0.0
    %507 = vmatprep.subr.mxu0 0.0
    %508 = vmatpush1.msra.mxu0 0.0
    %509 = vmatprep.subr.mxu0 0.0
    %510 = vmatpush1.msra.mxu0 0.0
    %511 = vmatprep.subr.mxu0 0.0
    %512 = vmatpush1.msra.mxu0 0.0
    %513 = vmatprep.subr.mxu0 0.0
    %514 = vmatpush1.msra.mxu0 0.0
    %515 = vmatprep.subr.mxu0 0.0
    %516 = vmatpush1.msra.mxu0 0.0
    %517 = vmatprep.subr.mxu0 0.0
    %518 = vmatpush1.msra.mxu0 0.0
    %519 = vmatprep.subr.mxu0 0.0
    %520 = vmatpush1.msra.mxu0 0.0
    %521 = vmatprep.subr.mxu0 0.0
    %522 = vmatpush1.msra.mxu0 0.0
    %523 = vmatprep.subr.mxu0 0.0
    %524 = vmatpush1.msra.mxu0 0.0
    %525 = vmatprep.subr.mxu0 0.0
    %526 = vmatpush1.msra.mxu0 0.0
    %527 = vmatprep.subr.mxu0 0.0
    %528 = vmatpush1.msra.mxu0 0.0
    %529 = vmatprep.subr.mxu0 0.0
    %530 = vmatpush1.msra.mxu0 0.0
    %531 = vmatprep.subr.mxu0 0.0
    %532 = vmatpush1.msra.mxu0 0.0
    %533 = vmatprep.subr.mxu0 0.0
    %534 = vmatpush1.msra.mxu0 0.0
    %535 = vmatprep.subr.mxu0 0.0
    %536 = vmatpush1.msra.mxu0 0.0
    %537 = vmatprep.subr.mxu0 0.0
    %538 = vmatpush1.msra.mxu0 0.0
    %539 = vmatprep.subr.mxu0 0.0
    %540 = vmatpush1.msra.mxu0 0.0
    %541 = vmatprep.subr.mxu0 0.0
    %542 = vmatpush1.msra.mxu0 0.0
    %543 = vmatprep.mubr.f32.mxu0 0.0
    %544 = vmatmul.mubr.f32.gmra.mrb[0].mxu0 %v397
    %v545 = vpop.f32.mrb[0].mxu0
    %v546 = vadd.f32 %v371, %v545
    %v547 = vpop.f32.mrb[0].mxu0
    %548 = vmatprep.mubr.f32.mxu0 0.0
    %549 = vmatmul.mubr.f32.gmra.mrb[0].mxu0 %v400
    %v550 = vpop.f32.mrb[0].mxu0
    %v551 = vadd.f32 %v374, %v550
    %v552 = vpop.f32.mrb[0].mxu0
    %553 = vdwg.mxu0
    %v554 = vmax.f32 %v469, 0.0
    %v555 = vmax.f32 %v471, 0.0
    %v556 = vmax.f32 %v546, 0.0
    %v557 = vmax.f32 %v475, 0.0
    %v558 = vmax.f32 %v477, 0.0
    %v559 = vmax.f32 %v551, 0.0
    %v561 = vlaneseq
    %v562 = vshrl.u32 %v561, 7
    %v563 = vsub.s32 0, %v562
    %v564 = vrot.slane %v378, %v563
    %v565 = vlaneseq
    %v566 = vshrl.u32 %v565, 7
    %v567 = vsub.s32 1, %v566
    %v568 = vrot.slane %v378, %v567
    %v569 = vlaneseq
    %v570 = vshrl.u32 %v569, 7
    %v571 = vsub.s32 2, %v570
    %v572 = vrot.slane %v378, %v571
    %v576 = vmul.f32 %v554, %v564
    %v577 = vmul.f32 %v555, %v568
    %v578 = vmul.f32 %v556, %v572
    %v579 = vmul.f32 %v557, %v564
    %v580 = vmul.f32 %v558, %v568
    %v581 = vmul.f32 %v559, %v572
    %v582 = vadd.f32 %v576, %v577
    %v583 = vadd.f32 %v582, %v578
    %584 = vadd.xlane.f32.xlu0 %v583
    %v585 = vpop.xlane.xlu0 %584
    %v586 = vadd.f32 %v579, %v580
    %v587 = vadd.f32 %v586, %v581
    %588 = vadd.xlane.f32.xlu0 %v587
    %v589 = vpop.xlane.xlu0 %588
    %v590 = vmul.f32 %v585, %v375
    %v591 = vmul.f32 %v589, %v376
    %v592 = vadd.f32 %v590, %v591
    %v593 = vrot.slane %v592, 4
    %v594 = vadd.f32 %v592, %v593
    %v595 = vrot.slane %v594, 2
    %v596 = vadd.f32 %v594, %v595
    %v597 = vrot.slane %v596, 1
    %v598 = vadd.f32 %v596, %v597
    %v599 = vadd.f32 %v598, %v379
    %600 = vst [vmem:[%s2] sm:$0x1] %v599
    // Predicated region
    $region14: #{newnet_forward.1} parent=1 // pred_check
      _
    $region15: #{newnet_forward.1} parent=1 // pred_check_branch
      %602 = sbr.rel (0) target = $region17
    $region16: #{newnet_forward.1} parent=1 // pred_region
      _
    $region17: #{newnet_forward.1} parent=1 // pred_fallthru
      _
    // Predicated region
    $region18: #{newnet_forward.1} parent=1 // pred_check
      _
    $region19: #{newnet_forward.1} parent=1 // pred_check_branch
      %604 = sbr.rel (0) target = $region21
    $region20: #{newnet_forward.1} parent=1 // pred_region
      _
    $region21: #{newnet_forward.1} parent=1 // pred_fallthru
      _
    %605 = vsyncpa [#allocation5], 1

</llo_original>
